<compile_context>
chip_gen: v6e
topology: v6e:2x2x1
jax: 0.10.0
libtpu: 0.0.40
codegen_flags: <defaults>
</compile_context>

<pallas_src>
import math

import jax
import jax.numpy as jnp
import numpy as np
from jax.experimental import pallas as pl
from jax.experimental.pallas import tpu as pltpu


def pe_kernel(x_ref, m_ref, b_ref, o_ref):
    # Cast in-register (free on the VPU; avoids wrapper-side upcast / extra DMA).
    x = x_ref[...].astype(jnp.float32)
    # One MXU matmul realizes the scale*freq expansion; the broadcast bias adds
    # +pi/2 on cos columns so a single sin covers both sin and cos outputs.
    phase = jnp.dot(x, m_ref[...], preferred_element_type=jnp.float32) + b_ref[...]
    # TODO(synk): v7x is VALU-bound on the sin polynomial; a turns-based range
    # reduction (fold 1/(2*pi) into M, t - round(t), short minimax poly) would
    # cut VALU ops ~2x, but needs validation at production phase magnitudes.
    o_ref[...] = jnp.sin(phase).astype(o_ref.dtype)


def _round_up(v, m):
    return ((v + m - 1) // m) * m


def _has_multiple_tensorcores():
    """True when dimension_semantics='parallel' can shard the grid across >1 TC."""
    try:
        kind = jax.devices()[0].device_kind.lower()
    except Exception:
        return False
    return ("v4" in kind) or ("7" in kind)


def pe_feature_map(x, scales, freq_bands, *, block_b=2048):
    """Pallas implementation of PEFeatureMap.forward."""
    orig_dtype = x.dtype
    B, D = x.shape
    F = freq_bands.shape[0]
    OUT = D * 2 * F

    # ---- lane packing: make OUTk a multiple of 128 (prefer 256) ----
    k = 1
    if OUT % 128 != 0:
        k = 128 // math.gcd(OUT, 128)
    if (k * OUT) % 256 != 0 and 2 * k * OUT <= 1024:
        k *= 2                          # fill the 256-wide MXU N dim when cheap
    while k > 1 and (k * OUT > 4096 or k * D > 512):
        k = max(1, k // 2)              # keep the block-diagonal matrix small

    pad = (-B) % k
    if pad:
        x = jnp.concatenate([x, jnp.zeros((pad, D), x.dtype)], axis=0)
    Bp = (B + pad) // k
    DK = k * D
    OUTk = k * OUT

    # ---- parameter glue (tiny, plain JAX, outside the kernel) ----
    # base[d, d'*2F + r] = (d == d') * scales[d'] * freq_row[r]
    freq32 = freq_bands.astype(jnp.float32)
    scales32 = scales.astype(jnp.float32)
    freq_row = jnp.concatenate([freq32, freq32])                               # (2F,)
    base = (jnp.eye(D, dtype=jnp.float32)[:, :, None]
            * (scales32[None, :, None] * freq_row[None, None, :])
            ).reshape(D, OUT)                                                  # (D, OUT)
    Mk = jnp.kron(jnp.eye(k, dtype=jnp.float32), base)                         # (DK, OUTk)
    # sin-only rewrite: cos(p) = sin(p + pi/2); bias added in-kernel, post-matmul.
    bias = jnp.where(jnp.arange(OUT) % (2 * F) >= F,
                     jnp.float32(np.pi / 2), jnp.float32(0.0))                 # (OUT,)
    bias_k = jnp.tile(bias, k)[None, :]                                        # (1, OUTk)

    x_packed = x.reshape(Bp, DK)          # native dtype; view-only reshape

    # ---- batch tiling with explicit VMEM budget ----
    in_itemsize = x.dtype.itemsize
    out_itemsize = np.dtype(orig_dtype).itemsize
    row_align = {1: 32, 2: 16}.get(out_itemsize, 8)   # native sublane tile of output dtype
    m_bytes = (DK * OUTk + OUTk) * 4
    # double-buffered in/out tiles + f32 matmul intermediate, kept under ~24 MiB
    # (fits v7x's 32 MiB scoped / 64 MiB physical VMEM with headroom).
    vmem_budget = 24 << 20
    per_row = 2 * (OUTk * out_itemsize + DK * in_itemsize) + OUTk * 4
    max_rows = max(row_align, (vmem_budget - m_bytes) // per_row)
    block_b = min(block_b, max_rows)

    multi_tc = _has_multiple_tensorcores()
    if Bp <= block_b:
        if multi_tc and Bp >= 2 * row_align:
            # >=2 grid steps so both TensorCores get work (v7x / v4 megacore only).
            block_b = _round_up(pl.cdiv(Bp, 2), row_align)
        else:
            # Single-TC parts: one full-batch block; splitting only adds step overhead.
            block_b = Bp
    else:
        block_b = max(row_align, (block_b // row_align) * row_align)
        if multi_tc:
            steps = pl.cdiv(Bp, block_b)
            if steps % 2:   # keep step count even so the 2 TCs stay balanced
                block_b = _round_up(pl.cdiv(Bp, steps + 1), row_align)
    grid = (pl.cdiv(Bp, block_b),)

    cost = pl.CostEstimate(
        flops=2 * Bp * DK * OUTk,
        transcendentals=Bp * OUTk,
        bytes_accessed=Bp * DK * in_itemsize + m_bytes + Bp * OUTk * out_itemsize,
    )

    out = pl.pallas_call(
        pe_kernel,
        out_shape=jax.ShapeDtypeStruct((Bp, OUTk), orig_dtype),
        grid=grid,
        in_specs=[
            pl.BlockSpec((block_b, DK), lambda i: (i, 0)),   # x tile (batch-tiled)
            pl.BlockSpec((DK, OUTk), lambda i: (0, 0)),      # phase projection (resident)
            pl.BlockSpec((1, OUTk), lambda i: (0, 0)),       # +pi/2 bias on cos columns
        ],
        out_specs=pl.BlockSpec((block_b, OUTk), lambda i: (i, 0)),
        compiler_params=pltpu.CompilerParams(
            dimension_semantics=("parallel",),
            vmem_limit_bytes=32 << 20,
        ),
        cost_estimate=cost,
    )(x_packed, Mk, bias_k)

    # unpack the k lane-packed rows back to (B, OUT)
    return out.reshape(Bp * k, OUT)[:B]


def pe_reference(x, scales, freq_bands):
    """Pure-JAX reference mirroring the PyTorch forward exactly."""
    xs = x * scales
    xe = xs[:, :, None] * freq_bands[None, None, :]
    pe = jnp.concatenate([jnp.sin(xe), jnp.cos(xe)], axis=-1)
    return pe.reshape(x.shape[0], -1)


if __name__ == "__main__":
    # Small shapes consistent with the module: in_features=4, out_features=32
    # -> num_frequencies = 32 // (2 * 4) = 4.  Batch = 8.
    B, in_features, out_features = 8, 4, 32
    F = out_features // (2 * in_features)

    key = jax.random.PRNGKey(0)
    x = jax.random.normal(key, (B, in_features), dtype=jnp.float32)

    # The module's `self.scales` buffer is never set in __init__; initialize it here.
    scales = jnp.array([1.0, 2.0, 0.5, 1.5], dtype=jnp.float32)
    freq_bands = (2.0 ** jnp.arange(F, dtype=jnp.float32)) * np.float32(np.pi)

    out = jax.block_until_ready(pe_feature_map(x, scales, freq_bands))

    ref = pe_reference(x, scales, freq_bands)
    # Tolerance accounts for (a) folding scale*freq into M (different rounding
    # order than the reference's two-step multiply), (b) the MXU's multi-pass
    # f32 matmul, and (c) the pi/2 bias being added before sin's range
    # reduction; all << 1e-3 at these phase magnitudes (|phase| <~ 1.5e2).
    np.testing.assert_allclose(np.asarray(out), np.asarray(ref), rtol=1e-3, atol=1e-3)
    print("KERNEL_OK")
</pallas_src>

<mosaic_0001>
module attributes {stable_mosaic.version = 11 : i64} {
  func.func @pe_kernel(%arg0: i32, %arg1: memref<1x32xf32, #tpu.memory_space<vmem>>, %arg2: memref<32x256xf32, #tpu.memory_space<vmem>>, %arg3: memref<1x256xf32, #tpu.memory_space<vmem>>, %arg4: memref<1x256xf32, #tpu.memory_space<vmem>>) attributes {dimension_semantics = [#tpu.dimension_semantics<parallel>], iteration_bounds = array<i64: 1>, scalar_prefetch = 0 : i64, scratch_operands = 0 : i64, tpu.core_type = #tpu.core_type<tc>, window_params = [{transform_indices = @transform_0, window_bounds = array<i64: 1, 32>}, {pipeline_mode = #tpu.pipeline_mode<synchronous>, transform_indices = @transform_1, window_bounds = array<i64: 32, 256>}, {pipeline_mode = #tpu.pipeline_mode<synchronous>, transform_indices = @transform_2, window_bounds = array<i64: 1, 256>}, {transform_indices = @transform_3, window_bounds = array<i64: 1, 256>}]} {
    %c0 = arith.constant 0 : index
    %c0_0 = arith.constant 0 : index
    %0 = vector.load %arg1[%c0, %c0_0] : memref<1x32xf32, #tpu.memory_space<vmem>>, vector<1x32xf32>
    %c0_1 = arith.constant 0 : index
    %c0_2 = arith.constant 0 : index
    %1 = vector.load %arg2[%c0_1, %c0_2] : memref<32x256xf32, #tpu.memory_space<vmem>>, vector<32x256xf32>
    %cst = arith.constant dense<0.000000e+00> : vector<1x256xf32>
    %2 = tpu.matmul %0, %1, %cst {dimension_numbers = #tpu.dot_dimension_numbers<[1], [0], [0], [1], [0, 0, 1, 1], [], []>} : vector<1x32xf32>, vector<32x256xf32>, vector<1x256xf32> -> vector<1x256xf32>
    %c0_3 = arith.constant 0 : index
    %c0_4 = arith.constant 0 : index
    %3 = vector.load %arg3[%c0_3, %c0_4] : memref<1x256xf32, #tpu.memory_space<vmem>>, vector<1x256xf32>
    %4 = arith.addf %2, %3 : vector<1x256xf32>
    %5 = math.sin %4 : vector<1x256xf32>
    %c0_5 = arith.constant 0 : index
    %c0_6 = arith.constant 0 : index
    %6 = vector.load %arg4[%c0_5, %c0_6] : memref<1x256xf32, #tpu.memory_space<vmem>>, vector<1x256xf32>
    tpu.vector_store %arg4[%c0_5, %c0_6], %5 {strides = array<i32>} : memref<1x256xf32, #tpu.memory_space<vmem>>, vector<1x256xf32>,
    return
  }
  func.func @transform_0(%arg0: i32) -> (i32, i32) {
    %c0_i32 = arith.constant 0 : i32
    %c0_i32_0 = arith.constant 0 : i32
    return %arg0, %c0_i32 : i32, i32
  }
  func.func @transform_1(%arg0: i32) -> (i32, i32) {
    %c0_i32 = arith.constant 0 : i32
    %c0_i32_0 = arith.constant 0 : i32
    %c0_i32_1 = arith.constant 0 : i32
    return %c0_i32, %c0_i32_0 : i32, i32
  }
  func.func @transform_2(%arg0: i32) -> (i32, i32) {
    %c0_i32 = arith.constant 0 : i32
    %c0_i32_0 = arith.constant 0 : i32
    %c0_i32_1 = arith.constant 0 : i32
    return %c0_i32, %c0_i32_0 : i32, i32
  }
  func.func @transform_3(%arg0: i32) -> (i32, i32) {
    %c0_i32 = arith.constant 0 : i32
    %c0_i32_0 = arith.constant 0 : i32
    return %arg0, %c0_i32 : i32, i32
  }
}

</mosaic_0001>

<llo_original>
// kernel: tpu_custom_call.1
$region0: #{tpu_custom_call.1}
  #allocation0 [shape = 'u32[]', space=smem, size = 0x4, offset = 0x4, fixed_abs, tag = 'smem constant byte address 0x4 - core index']
  #allocation1 [shape = 'u32[144,128]{1,0:T(1,128)}', space=vmem, size = 0x12000, scoped, tag = 'internal scratch']
  %s0 = inlined_call_operand.hbm [shape: f32[1,32], index: 0, kind: input, shape index: {}]
  %s1 = inlined_call_operand.hbm [shape: f32[32,256], index: 1, kind: input, shape index: {}]
  %s2 = inlined_call_operand.vmem [shape: f32[1,256], index: 2, kind: input, shape index: {}]
  %s3 = inlined_call_operand.hbm [shape: f32[1,256], index: 3, kind: output, shape index: {}]
  %s4 = sld [smem:[#allocation0]]
  $region30: #{tpu_custom_call.1} parent=0
    _
  %s6 = ssub.s32 1, %s4
  %s7 = scalar_select 0, %s6, %s4
  $region1: #{tpu_custom_call.1} parent=0
    #allocation2 [shape = 'u8[512]{0}', space=vmem, size = 0x400, scoped, tag = 'input window, operand 0, single buffered']
    #allocation3 [shape = 's32[1]{0}', space=sflag, size = 0x4, scoped, tag = 'scoped memory for tpu_custom_call.1']
    #allocation4 [shape = 's32[1]{0}', space=sflag, size = 0x4, scoped, tag = 'scoped memory for tpu_custom_call.1']
    #allocation5 [shape = 'u8[32768]{0}', space=vmem, size = 0x8000, scoped, tag = 'input window, operand 1, single buffered']
    #allocation6 [shape = 's32[1]{0}', space=sflag, size = 0x4, scoped, tag = 'scoped memory for tpu_custom_call.1']
    #allocation7 [shape = 'u8[1024]{0}', space=vmem, size = 0x400, scoped, tag = 'output window, operand 0, single buffered']
    %8 = vsyncpa [#allocation3], 0
    %9 = vsyncpa [#allocation6], 0
    %10 = vsyncpa [#allocation4], 0
    // Predicated region
    $region2: #{tpu_custom_call.1} parent=1 // pred_check
      _
    $region3: #{tpu_custom_call.1} parent=1 // pred_check_branch
      %12 = sbr.rel (0) target = $region5
    $region4: #{tpu_custom_call.1} parent=1 // pred_region
      %s14 = ssub.s32 16, 16
      %15 = vsyncadd [#allocation3], %s14
      %s17 = sshll.u32 [#allocation2], 4
      %s18 = int_to_ptr.vmem [resolvable:$true] %s17
      %20 = dma.hbm_to_vmem [thread:$0]  %s0, 16, %s18, [#allocation3]
    $region5: #{tpu_custom_call.1} parent=1 // pred_fallthru
      _
    // Predicated region
    $region6: #{tpu_custom_call.1} parent=1 // pred_check
      _
    $region7: #{tpu_custom_call.1} parent=1 // pred_check_branch
      %22 = sbr.rel (0) target = $region9
    $region8: #{tpu_custom_call.1} parent=1 // pred_region
      %s24 = ssub.s32 1024, 1024
      %25 = vsyncadd [#allocation6], %s24
      %s26 = sshll.u32 [#allocation5], 4
      %s27 = int_to_ptr.vmem [resolvable:$true] %s26
      %32 = dma.hbm_to_vmem [thread:$0]  %s1, 1024, %s27, [#allocation6], 256, 256, 16
    $region9: #{tpu_custom_call.1} parent=1 // pred_fallthru
      _
    // Predicated region
    $region10: #{tpu_custom_call.1} parent=1 // pred_check
      _
    $region11: #{tpu_custom_call.1} parent=1 // pred_check_branch
      %34 = sbr.rel (0) target = $region13
    $region12: #{tpu_custom_call.1} parent=1 // pred_region
      _
    $region13: #{tpu_custom_call.1} parent=1 // pred_fallthru
      _
    // Predicated region
    $region14: #{tpu_custom_call.1} parent=1 // pred_check
      _
    $region15: #{tpu_custom_call.1} parent=1 // pred_check_branch
      %36 = sbr.rel (0) target = $region17
    $region16: #{tpu_custom_call.1} parent=1 // pred_region
      %37 = dma.done [#allocation3], 16
    $region17: #{tpu_custom_call.1} parent=1 // pred_fallthru
      _
    // Predicated region
    $region18: #{tpu_custom_call.1} parent=1 // pred_check
      _
    $region19: #{tpu_custom_call.1} parent=1 // pred_check_branch
      %39 = sbr.rel (0) target = $region21
    $region20: #{tpu_custom_call.1} parent=1 // pred_region
      %40 = dma.done [#allocation6], 1024
    $region21: #{tpu_custom_call.1} parent=1 // pred_fallthru
      _
    %v41 = vld [vmem:[#allocation2] sm:$0x1]
    %v42 = vld [vmem:[#allocation5] sm:$0xff]
    %v43 = vld [vmem:[#allocation5 + $0x8] sm:$0xff]
    %v44 = vld [vmem:[#allocation5 + $0x10] sm:$0xff]
    %v45 = vld [vmem:[#allocation5 + $0x18] sm:$0xff]
    %v46 = vld [vmem:[#allocation5 + $0x20] sm:$0xff]
    %v47 = vld [vmem:[#allocation5 + $0x28] sm:$0xff]
    %v48 = vld [vmem:[#allocation5 + $0x30] sm:$0xff]
    %v49 = vld [vmem:[#allocation5 + $0x38] sm:$0xff]
    %v50 = vld [vmem:[%s2] sm:$0x3]
    %v52 = vlaneseq
    %v53 = vshrl.u32 %v52, 7
    %v54 = vsub.s32 0, %v53
    %v55 = vrot.slane %v50, %v54
    %v56 = vlaneseq
    %v57 = vshrl.u32 %v56, 7
    %v58 = vsub.s32 1, %v57
    %v59 = vrot.slane %v50, %v58
    %vm62 = vcmask 261120
    %v64 = vsel %vm62, %v41, 0
    %66 = vmatprep.subr.mxu0 0.0
    %67 = vmatpush1.msra.mxu0 0.0
    %68 = vmatprep.subr.mxu0 0.0
    %69 = vmatpush1.msra.mxu0 0.0
    %70 = vmatprep.subr.mxu0 0.0
    %71 = vmatpush1.msra.mxu0 0.0
    %72 = vmatprep.subr.mxu0 0.0
    %73 = vmatpush1.msra.mxu0 0.0
    %74 = vmatprep.subr.mxu0 0.0
    %75 = vmatpush1.msra.mxu0 0.0
    %76 = vmatprep.subr.mxu0 0.0
    %77 = vmatpush1.msra.mxu0 0.0
    %78 = vmatprep.subr.mxu0 0.0
    %79 = vmatpush1.msra.mxu0 0.0
    %80 = vmatprep.subr.mxu0 0.0
    %81 = vmatpush1.msra.mxu0 0.0
    %82 = vmatprep.subr.mxu0 0.0
    %83 = vmatpush1.msra.mxu0 0.0
    %84 = vmatprep.subr.mxu0 0.0
    %85 = vmatpush1.msra.mxu0 0.0
    %86 = vmatprep.subr.mxu0 0.0
    %87 = vmatpush1.msra.mxu0 0.0
    %88 = vmatprep.subr.mxu0 0.0
    %89 = vmatpush1.msra.mxu0 0.0
    %90 = vmatprep.subr.mxu0 %v49
    %91 = vmatpush1.msra.mxu0 %v48
    %92 = vmatprep.subr.mxu0 %v47
    %93 = vmatpush1.msra.mxu0 %v46
    %94 = vmatprep.subr.mxu0 %v45
    %95 = vmatpush1.msra.mxu0 %v44
    %96 = vmatprep.subr.mxu0 %v43
    %97 = vmatpush1.msra.mxu0 %v42
    %98 = vmatprep.subr.mxu0 0.0
    %99 = vmatpush2.msra.mxu0 0.0
    %100 = vmatprep.subr.mxu0 0.0
    %101 = vmatpush2.msra.mxu0 0.0
    %102 = vmatprep.subr.mxu0 0.0
    %103 = vmatpush2.msra.mxu0 0.0
    %104 = vmatprep.subr.mxu0 0.0
    %105 = vmatpush2.msra.mxu0 0.0
    %106 = vmatprep.subr.mxu0 0.0
    %107 = vmatpush2.msra.mxu0 0.0
    %108 = vmatprep.subr.mxu0 0.0
    %109 = vmatpush2.msra.mxu0 0.0
    %110 = vmatprep.subr.mxu0 0.0
    %111 = vmatpush2.msra.mxu0 0.0
    %112 = vmatprep.subr.mxu0 0.0
    %113 = vmatpush2.msra.mxu0 0.0
    %114 = vmatprep.subr.mxu0 0.0
    %115 = vmatpush2.msra.mxu0 0.0
    %116 = vmatprep.subr.mxu0 0.0
    %117 = vmatpush2.msra.mxu0 0.0
    %118 = vmatprep.subr.mxu0 0.0
    %119 = vmatpush2.msra.mxu0 0.0
    %120 = vmatprep.subr.mxu0 0.0
    %121 = vmatpush2.msra.mxu0 0.0
    %122 = vmatprep.subr.mxu0 0.0
    %123 = vmatpush2.msra.mxu0 0.0
    %124 = vmatprep.subr.mxu0 0.0
    %125 = vmatpush2.msra.mxu0 0.0
    %126 = vmatprep.subr.mxu0 0.0
    %127 = vmatpush2.msra.mxu0 0.0
    %128 = vmatprep.subr.mxu0 0.0
    %129 = vmatpush2.msra.mxu0 0.0
    %130 = vmatprep.mubr.f32.mxu0 0.0
    %131 = vmatmul.mubr.f32.gmra.mxu0 %v64
    %v132 = vpop.f32.mrf.mxu0
    %v133 = vadd.f32 %v55, %v132
    %v134 = vpop.f32.mrf.mxu0
    %v135 = vadd.f32 %v59, %v134
    %136 = vdwg.mxu0
    %v137 = vand.u32 2147483647, %v133
    %vm138 = vcmp.le.f32.partialorder %v137, 0.7853982
    %vm139 = vcmp.lt.s32.totalorder %v133, 0
    %v140 = vand.u32 %v133, 2139095040
    %v141 = vshrl.u32 %v140, 23
    %v142 = vsub.s32 %v141, 127
    %v143 = vand.u32 2147483647, %v133
    %v144 = vand.u32 %v143, 8388607
    %v145 = vor.u32 %v144, 8388608
    %v146 = vsub.s32 0, %v145
    %v147 = vadd.s32 %v142, 1
    %vm148 = vcmp.gt.s32.totalorder %v147, 0
    %v149 = vsel %vm148, %v147, 0
    %v150 = vshrl.u32 %v149, 5
    %v151 = vand.u32 %v149, 31
    %v152 = vsub.s32 32, %v151
    %v153 = vshrl.u32 683565275, %v152
    %v154 = vshll.u32 683565275, %v151
    %v155 = vshrl.u32 2475754826, %v152
    %v156 = vor.u32 %v154, %v155
    %v157 = vshll.u32 2475754826, %v151
    %v158 = vshrl.u32 2131351028, %v152
    %v159 = vor.u32 %v157, %v158
    %v160 = vshll.u32 2131351028, %v151
    %v161 = vshrl.u32 2102212464, %v152
    %v162 = vor.u32 %v160, %v161
    %v163 = vshll.u32 2102212464, %v151
    %v164 = vshrl.u32 920167782, %v152
    %v165 = vor.u32 %v163, %v164
    %v166 = vshll.u32 920167782, %v151
    %v167 = vshrl.u32 1326507024, %v152
    %v168 = vor.u32 %v166, %v167
    %vm169 = vcmp.lt.s32.totalorder %v150, 1
    %vm170 = vcmp.lt.s32.totalorder %v150, 2
    %vm171 = vcmp.lt.s32.totalorder %v150, 3
    %vm172 = vcmp.lt.s32.totalorder %v150, 4
    %v173 = vsel %vm169, %v153, %v156
    %v174 = vsel %vm172, %v162, 2102212464
    %v175 = vsel %vm171, %v159, %v174
    %v176 = vsel %vm170, %v173, %v175
    %v177 = vsel %vm169, %v156, %v159
    %v178 = vsel %vm172, %v165, 920167782
    %v179 = vsel %vm171, %v162, %v178
    %v180 = vsel %vm170, %v177, %v179
    %v181 = vsel %vm169, %v159, %v162
    %v182 = vsel %vm172, %v168, 1326507024
    %v183 = vsel %vm171, %v165, %v182
    %v184 = vsel %vm170, %v181, %v183
    %v185 = vshll.u32 %v145, 8
    %v186 = vmul.u32.u64.compose %v185, %v184
    %v187 = vextract.low.u32 %v186
    %v188 = vextract.high.u32 %v186
    %v189 = vmul.u32.u64.compose %v185, %v180
    %v190 = vextract.low.u32 %v189
    %v191 = vextract.high.u32 %v189
    %v192 = vmul.u32 %v185, %v176
    %v193 = vadd.s32 %v188, %v190
    %vm194 = vc.u32 %v188, %v190
    %v195 = vadd.s32 %v191, 1
    %v196 = vsel %vm194, %v195, %v191
    %v197 = vadd.s32 %v192, %v196
    %v198 = vadd.s32 %v197, 536870912
    %v199 = vshrl.u32 %v198, 30
    %v200 = vshll.u32 %v199, 30
    %v201 = vsub.s32 %v197, %v200
    %vm202 = vcmp.lt.s32.totalorder %v201, 0
    %v203 = vsub.s32 0, %v201
    %v204 = vsel %vm202, %v203, %v201
    %v205 = vclz %v204
    %v206 = vsub.s32 %v205, 2
    %vm207 = vcmp.gt.s32.totalorder 0, %v206
    %v208 = vsel %vm207, 0, %v206
    %v209 = vsub.s32 32, %v208
    %v210 = vshll.u32 %v201, %v208
    %v211 = vshrl.u32 %v193, %v209
    %v212 = vor.u32 %v210, %v211
    %v213 = vsub.s32 4294967266, %v208
    %v214 = vadd.s32 %v213, 127
    %v215 = vshll.u32 %v214, 23
    %v216 = vor.u32 4788187, %v215
    %v217 = vand.u32 2147483647, %v216
    %v219 = vcvt.s32.f32 %v212
    %v220 = vmul.f32 %v219, %v217
    %v221 = vxor.u32 %v220, 2147483648
    %v222 = vsel %vm139, %v221, %v220
    %v223 = vsub.s32 4, %v199
    %v224 = vsel %vm139, %v223, %v199
    %v225 = vsel %vm138, %v133, %v222
    %v226 = vsel %vm138, 0, %v224
    %v227 = vcosq.f32.pop %v225
    %v228 = vsinq.f32.pop %v225
    %vm229 = vweird.f32 %v133
    %v230 = vadd.s32 %v226, 3
    %v231 = vand.u32 %v230, 3
    %vm232 = vcmp.lt.s32.totalorder %v231, 2
    %vm233 = vcmp.eq.s32.totalorder %v231, 0
    %v234 = vxor.u32 %v228, 2147483648
    %v235 = vsel %vm233, %v227, %v234
    %vm236 = vcmp.eq.s32.totalorder %v231, 2
    %v237 = vxor.u32 %v227, 2147483648
    %v238 = vsel %vm236, %v237, %v228
    %v239 = vsel %vm232, %v235, %v238
    %v240 = vsel %vm229, nan, %v239
    %v241 = vand.u32 2147483647, %v135
    %vm242 = vcmp.le.f32.partialorder %v241, 0.7853982
    %vm243 = vcmp.lt.s32.totalorder %v135, 0
    %v244 = vand.u32 %v135, 2139095040
    %v245 = vshrl.u32 %v244, 23
    %v246 = vsub.s32 %v245, 127
    %v247 = vand.u32 2147483647, %v135
    %v248 = vand.u32 %v247, 8388607
    %v249 = vor.u32 %v248, 8388608
    %v250 = vsub.s32 0, %v249
    %v251 = vadd.s32 %v246, 1
    %vm252 = vcmp.gt.s32.totalorder %v251, 0
    %v253 = vsel %vm252, %v251, 0
    %v254 = vshrl.u32 %v253, 5
    %v255 = vand.u32 %v253, 31
    %v256 = vsub.s32 32, %v255
    %v257 = vshrl.u32 683565275, %v256
    %v258 = vshll.u32 683565275, %v255
    %v259 = vshrl.u32 2475754826, %v256
    %v260 = vor.u32 %v258, %v259
    %v261 = vshll.u32 2475754826, %v255
    %v262 = vshrl.u32 2131351028, %v256
    %v263 = vor.u32 %v261, %v262
    %v264 = vshll.u32 2131351028, %v255
    %v265 = vshrl.u32 2102212464, %v256
    %v266 = vor.u32 %v264, %v265
    %v267 = vshll.u32 2102212464, %v255
    %v268 = vshrl.u32 920167782, %v256
    %v269 = vor.u32 %v267, %v268
    %v270 = vshll.u32 920167782, %v255
    %v271 = vshrl.u32 1326507024, %v256
    %v272 = vor.u32 %v270, %v271
    %vm273 = vcmp.lt.s32.totalorder %v254, 1
    %vm274 = vcmp.lt.s32.totalorder %v254, 2
    %vm275 = vcmp.lt.s32.totalorder %v254, 3
    %vm276 = vcmp.lt.s32.totalorder %v254, 4
    %v277 = vsel %vm273, %v257, %v260
    %v278 = vsel %vm276, %v266, 2102212464
    %v279 = vsel %vm275, %v263, %v278
    %v280 = vsel %vm274, %v277, %v279
    %v281 = vsel %vm273, %v260, %v263
    %v282 = vsel %vm276, %v269, 920167782
    %v283 = vsel %vm275, %v266, %v282
    %v284 = vsel %vm274, %v281, %v283
    %v285 = vsel %vm273, %v263, %v266
    %v286 = vsel %vm276, %v272, 1326507024
    %v287 = vsel %vm275, %v269, %v286
    %v288 = vsel %vm274, %v285, %v287
    %v289 = vshll.u32 %v249, 8
    %v290 = vmul.u32.u64.compose %v289, %v288
    %v291 = vextract.low.u32 %v290
    %v292 = vextract.high.u32 %v290
    %v293 = vmul.u32.u64.compose %v289, %v284
    %v294 = vextract.low.u32 %v293
    %v295 = vextract.high.u32 %v293
    %v296 = vmul.u32 %v289, %v280
    %v297 = vadd.s32 %v292, %v294
    %vm298 = vc.u32 %v292, %v294
    %v299 = vadd.s32 %v295, 1
    %v300 = vsel %vm298, %v299, %v295
    %v301 = vadd.s32 %v296, %v300
    %v302 = vadd.s32 %v301, 536870912
    %v303 = vshrl.u32 %v302, 30
    %v304 = vshll.u32 %v303, 30
    %v305 = vsub.s32 %v301, %v304
    %vm306 = vcmp.lt.s32.totalorder %v305, 0
    %v307 = vsub.s32 0, %v305
    %v308 = vsel %vm306, %v307, %v305
    %v309 = vclz %v308
    %v310 = vsub.s32 %v309, 2
    %vm311 = vcmp.gt.s32.totalorder 0, %v310
    %v312 = vsel %vm311, 0, %v310
    %v313 = vsub.s32 32, %v312
    %v314 = vshll.u32 %v305, %v312
    %v315 = vshrl.u32 %v297, %v313
    %v316 = vor.u32 %v314, %v315
    %v317 = vsub.s32 4294967266, %v312
    %v318 = vadd.s32 %v317, 127
    %v319 = vshll.u32 %v318, 23
    %v320 = vor.u32 4788187, %v319
    %v321 = vand.u32 2147483647, %v320
    %v323 = vcvt.s32.f32 %v316
    %v324 = vmul.f32 %v323, %v321
    %v325 = vxor.u32 %v324, 2147483648
    %v326 = vsel %vm243, %v325, %v324
    %v327 = vsub.s32 4, %v303
    %v328 = vsel %vm243, %v327, %v303
    %v329 = vsel %vm242, %v135, %v326
    %v330 = vsel %vm242, 0, %v328
    %v331 = vcosq.f32.pop %v329
    %v332 = vsinq.f32.pop %v329
    %vm333 = vweird.f32 %v135
    %v334 = vadd.s32 %v330, 3
    %v335 = vand.u32 %v334, 3
    %vm336 = vcmp.lt.s32.totalorder %v335, 2
    %vm337 = vcmp.eq.s32.totalorder %v335, 0
    %v338 = vxor.u32 %v332, 2147483648
    %v339 = vsel %vm337, %v331, %v338
    %vm340 = vcmp.eq.s32.totalorder %v335, 2
    %v341 = vxor.u32 %v331, 2147483648
    %v342 = vsel %vm340, %v341, %v332
    %v343 = vsel %vm336, %v339, %v342
    %v344 = vsel %vm333, nan, %v343
    %v347 = vcombine.low %v240, %v344
    %v349 = vunpack.c.l.s4 1966171168
    %v350 = vunpack.c.0.s8 %v349
    %v351 = vlaneseq
    %v352 = vshrl.u32 %v351, 7
    %v353 = vsub.s32 %v350, %v352
    %v354 = vrot.slane %v347, %v353
    %v356 = vunpack.c.l.s4 1966171168
    %v357 = vunpack.c.0.s8 %v356
    %v358 = vlaneseq
    %v359 = vshrl.u32 %v358, 7
    %v360 = vsub.s32 %v357, %v359
    %v361 = vrot.slane %v354, %v360
    %v363 = vlaneseq
    %vm364 = vcmp.ge.s32.totalorder %v363, 0
    %vm365 = vcmp.lt.s32.totalorder %v363, 256
    %vm366 = vmand %vm364, %vm365
    %367 = vst.msk [vmem:[#allocation7] sm:$0x3] %vm366, %v361
    // Predicated region
    $region22: #{tpu_custom_call.1} parent=1 // pred_check
      _
    $region23: #{tpu_custom_call.1} parent=1 // pred_check_branch
      %369 = sbr.rel (0) target = $region25
    $region24: #{tpu_custom_call.1} parent=1 // pred_region
      %s371 = ssub.s32 32, 32
      %372 = vsyncadd [#allocation4], %s371
      %s374 = sshll.u32 [#allocation7], 4
      %s375 = int_to_ptr.vmem [resolvable:$true] %s374
      %377 = dma.vmem_to_hbm [thread:$0]  %s375, 32, %s3, [#allocation4]
    $region25: #{tpu_custom_call.1} parent=1 // pred_fallthru
      _
    // Predicated region
    $region26: #{tpu_custom_call.1} parent=1 // pred_check
      _
    $region27: #{tpu_custom_call.1} parent=1 // pred_check_branch
      %379 = sbr.rel (0) target = $region29
    $region28: #{tpu_custom_call.1} parent=1 // pred_region
      %380 = dma.done [#allocation4], 32
    $region29: #{tpu_custom_call.1} parent=1 // pred_fallthru
      _
    %381 = vsyncpa [#allocation3], 1
    %382 = vsyncpa [#allocation6], 1
    %383 = vsyncpa [#allocation4], 1

</llo_original>
